<compile_context>
chip_gen: v7x
topology: tpu7x:2x2x1
jax: 0.10.0
libtpu: 0.0.40
codegen_flags: <defaults>
</compile_context>

<pallas_src>
import functools
import math

import jax
import jax.numpy as jnp
from jax.experimental import pallas as pl
from jax.experimental.pallas import tpu as pltpu


def _round_up(x, m):
    return ((x + m - 1) // m) * m


def _vmem_cap_bytes():
    # Generation-aware scoped-VMEM ceiling: ~75% of physical VMEM
    # (v7x: 64 MiB -> ~48 MiB, v5e/v6e: 128 MiB -> ~96 MiB), never above 100 MiB.
    try:
        phys = int(pltpu.get_tpu_info().vmem_capacity_bytes)
    except Exception:
        phys = 128 * 1024 * 1024
    return int(min(0.75 * phys, 100 * 1024 * 1024))


def _patch_embed_kernel(x_ref, w_ref, b_ref, g_ref, bt_ref, o_ref, *, e_real, eps):
    # x_ref : (tm, K_pad)    bf16 patch-pixel rows (cast already done in the wrapper)
    # w_ref : (K_pad, E_pad) bf16 projection weight, VMEM-resident
    # b_ref / g_ref / bt_ref : (1, E_pad) f32 conv bias / LN gamma / LN beta, VMEM-resident
    # o_ref : (tm, E_pad)
    y = jnp.dot(x_ref[...], w_ref[...], preferred_element_type=jnp.float32) + b_ref[...]

    inv_e = 1.0 / float(e_real)
    # Padded E lanes of y are exactly 0 (zero-padded weight columns and bias), so the sum is exact.
    mean = jnp.sum(y, axis=-1, keepdims=True) * inv_e
    centered = y - mean
    e_pad = y.shape[-1]
    if e_pad != e_real:  # static branch: padded lanes hold -mean after centering -> mask for var
        lane = jax.lax.broadcasted_iota(jnp.int32, y.shape, 1)
        centered = jnp.where(lane < e_real, centered, 0.0)
    var = jnp.sum(centered * centered, axis=-1, keepdims=True) * inv_e
    inv_std = jax.lax.rsqrt(var + eps)                     # EUP op, overlaps with MXU/VPU work
    o_ref[...] = (centered * inv_std * g_ref[...] + bt_ref[...]).astype(o_ref.dtype)


def patch_embed_pallas(x, w, b, gamma, beta, *, patch_size=16, eps=1e-5,
                       tm=512, mxu_dtype=jnp.bfloat16, out_dtype=None):
    """x: (B, C, H, W); w: (E, C, ph, pw) conv weight; b/gamma/beta: (E,).
    Returns (tokens (B, N, E), (H // ph, W // pw)) matching the PyTorch PatchEmbed."""
    if isinstance(patch_size, int):
        ph = pw = patch_size
    else:
        ph, pw = patch_size
    B, C, H, W = x.shape
    E = w.shape[0]
    Hp, Wp = H // ph, W // pw
    N = Hp * Wp
    K = C * ph * pw
    M = B * N
    out_dtype = x.dtype if out_dtype is None else jnp.dtype(out_dtype)

    # ---- layout plumbing in the wrapper (stride==kernel conv -> non-overlapping im2col) ----
    # Cast to bf16 here so the kernel's biggest HBM stream is 2 B/elem.
    # TODO(synk): the im2col itself could be fused into the kernel (grid over B*Hp, in-kernel
    # reshuffle) to remove this extra HBM pass over the activations entirely.
    patches = (x.reshape(B, C, Hp, ph, Wp, pw)
                .transpose(0, 2, 4, 1, 3, 5)
                .reshape(M, K)
                .astype(mxu_dtype))
    w2d = w.reshape(E, K).T.astype(mxu_dtype)              # (K, E) bf16 weights

    # ---- lane-dense 128 padding only where needed (common ViT case K=E=768 skips it);
    #      the row (M) axis is NOT padded: grid = cdiv(M, tm), ragged last block is masked ----
    K_pad = _round_up(K, 128)
    E_pad = _round_up(E, 128)
    if K_pad != K:
        patches = jnp.pad(patches, ((0, 0), (0, K_pad - K)))
        w2d = jnp.pad(w2d, ((0, K_pad - K), (0, 0)))
    if E_pad != E:
        w2d = jnp.pad(w2d, ((0, 0), (0, E_pad - E)))
    b2d = b.astype(jnp.float32).reshape(1, E)
    g2d = gamma.astype(jnp.float32).reshape(1, E)
    bt2d = beta.astype(jnp.float32).reshape(1, E)
    if E_pad != E:
        b2d = jnp.pad(b2d, ((0, 0), (0, E_pad - E)))
        g2d = jnp.pad(g2d, ((0, 0), (0, E_pad - E)))
        bt2d = jnp.pad(bt2d, ((0, 0), (0, E_pad - E)))

    # ---- tile size / VMEM budget (generation aware, auto-shrink so it always fits) ----
    mxu_bytes = jnp.dtype(mxu_dtype).itemsize
    out_bytes = out_dtype.itemsize
    tm = max(16, min(_round_up(tm, 16), _round_up(M, 16)))  # don't over-pad tiny inputs

    cap = _vmem_cap_bytes()

    def working_set(t):
        return (K_pad * E_pad * mxu_bytes + 3 * E_pad * 4   # resident weight + params (1 buffer)
                + 2 * t * K_pad * mxu_bytes                  # double-buffered bf16 x tiles
                + 2 * t * E_pad * out_bytes                  # double-buffered out tiles
                + 2 * t * E_pad * 4)                         # f32 intermediates

    while tm > 16 and working_set(tm) > cap:
        tm = max(16, _round_up(tm // 2, 16))
    vmem_needed = working_set(tm)
    vmem_limit = int(min(max(int(1.25 * vmem_needed), 16 * 1024 * 1024), cap))

    grid = (pl.cdiv(M, tm),)

    cost = pl.CostEstimate(
        flops=2 * M * K * E + 10 * M * E,
        transcendentals=M,  # one rsqrt per token row (advisory)
        bytes_accessed=(M * K_pad * mxu_bytes + K_pad * E_pad * mxu_bytes
                        + 3 * E_pad * 4 + M * E_pad * out_bytes),
    )

    kernel = functools.partial(_patch_embed_kernel, e_real=E, eps=float(eps))
    vmem_resident = pl.BlockSpec(memory_space=pltpu.MemorySpace.VMEM)  # whole array, no pipeline

    out2d = pl.pallas_call(
        kernel,
        out_shape=jax.ShapeDtypeStruct((M, E_pad), out_dtype),
        grid_spec=pltpu.PrefetchScalarGridSpec(
            num_scalar_prefetch=0,
            grid=grid,
            in_specs=[
                pl.BlockSpec((tm, K_pad), lambda i: (i, 0)),  # patch rows: pipelined, ragged tail ok
                vmem_resident,                                 # W (single buffer, resident)
                vmem_resident,                                 # conv bias
                vmem_resident,                                 # LN gamma
                vmem_resident,                                 # LN beta
            ],
            out_specs=pl.BlockSpec((tm, E_pad), lambda i: (i, 0)),
        ),
        compiler_params=pltpu.CompilerParams(
            # TODO(synk): evaluate pltpu.CORE_PARALLEL on v7x (2 TCs) once validated there;
            # plain "parallel" is safe on all generations.
            dimension_semantics=("parallel",),
            vmem_limit_bytes=vmem_limit,
        ),
        cost_estimate=cost,
    )(patches, w2d, b2d, g2d, bt2d)

    tokens = out2d if E_pad == E else out2d[:, :E]
    return tokens.reshape(B, N, E), (Hp, Wp)


if __name__ == "__main__":
    key = jax.random.PRNGKey(0)
    kx, kw, kb, kg, kbt = jax.random.split(key, 5)

    # Small PatchEmbed shapes: batch=2, in_chans=4, image 64x48, patch 8 -> 8x6=48 tokens/img,
    # embed_dim=128 (lane-dense). M = 96 rows; tm=64 -> 2 grid steps with a ragged last tile.
    B, C, H, W = 2, 4, 64, 48
    ps = 8
    E = 128
    K = C * ps * ps

    x = jax.random.normal(kx, (B, C, H, W), jnp.float32)
    bound = 1.0 / math.sqrt(K)                                  # nn.Conv2d default init range
    w = jax.random.uniform(kw, (E, C, ps, ps), jnp.float32, -bound, bound)
    b = jax.random.uniform(kb, (E,), jnp.float32, -bound, bound)
    gamma = 1.0 + 0.1 * jax.random.normal(kg, (E,), jnp.float32)
    beta = 0.1 * jax.random.normal(kbt, (E,), jnp.float32)

    out, (Hp, Wp) = patch_embed_pallas(x, w, b, gamma, beta, patch_size=ps, tm=64)
    out = jax.block_until_ready(out)

    # Pure-JAX reference: high-precision strided conv + LayerNorm (f32).
    y = jax.lax.conv_general_dilated(
        x, w, window_strides=(ps, ps), padding="VALID",
        dimension_numbers=("NCHW", "OIHW", "NCHW"),
        precision=jax.lax.Precision.HIGHEST)
    y = y + b.reshape(1, E, 1, 1)
    tok = y.reshape(B, E, Hp * Wp).transpose(0, 2, 1)           # (B, N, E)
    mean = tok.mean(-1, keepdims=True)
    var = ((tok - mean) ** 2).mean(-1, keepdims=True)
    ref = (tok - mean) / jnp.sqrt(var + 1e-5) * gamma + beta

    assert out.shape == (B, Hp * Wp, E)
    assert (Hp, Wp) == (H // ps, W // ps)
    err = jnp.abs(out - ref)
    # bf16 patches + bf16 weights on the MXU with f32 accumulation -> loosened tolerance.
    assert float(err.max()) < 2e-2 and float(err.mean()) < 5e-3, (
        float(err.max()), float(err.mean()))

    print("KERNEL_OK")
</pallas_src>

<mosaic_0001>
module attributes {stable_mosaic.version = 11 : i64} {
  func.func @_patch_embed_kernel(%arg0: i32, %arg1: memref<64x256xbf16, #tpu.memory_space<vmem>>, %arg2: memref<256x128xbf16, #tpu.memory_space<vmem>>, %arg3: memref<1x128xf32, #tpu.memory_space<vmem>>, %arg4: memref<1x128xf32, #tpu.memory_space<vmem>>, %arg5: memref<1x128xf32, #tpu.memory_space<vmem>>, %arg6: memref<64x128xf32, #tpu.memory_space<vmem>>) attributes {dimension_semantics = [#tpu.dimension_semantics<parallel>], iteration_bounds = array<i64: 2>, scalar_prefetch = 0 : i64, scratch_operands = 0 : i64, tpu.core_type = #tpu.core_type<tc>, window_params = [{transform_indices = @transform_0, window_bounds = array<i64: 64, 256>}, {pipeline_mode = #tpu.pipeline_mode<synchronous>, transform_indices = @transform_1, window_bounds = array<i64: 256, 128>}, {pipeline_mode = #tpu.pipeline_mode<synchronous>, transform_indices = @transform_2, window_bounds = array<i64: 1, 128>}, {pipeline_mode = #tpu.pipeline_mode<synchronous>, transform_indices = @transform_3, window_bounds = array<i64: 1, 128>}, {pipeline_mode = #tpu.pipeline_mode<synchronous>, transform_indices = @transform_4, window_bounds = array<i64: 1, 128>}, {transform_indices = @transform_5, window_bounds = array<i64: 64, 128>}]} {
    %c0 = arith.constant 0 : index
    %c0_0 = arith.constant 0 : index
    %0 = vector.load %arg1[%c0, %c0_0] : memref<64x256xbf16, #tpu.memory_space<vmem>>, vector<64x256xbf16>
    %c0_1 = arith.constant 0 : index
    %c0_2 = arith.constant 0 : index
    %1 = vector.load %arg2[%c0_1, %c0_2] : memref<256x128xbf16, #tpu.memory_space<vmem>>, vector<256x128xbf16>
    %cst = arith.constant dense<0.000000e+00> : vector<64x128xf32>
    %2 = tpu.matmul %0, %1, %cst {dimension_numbers = #tpu.dot_dimension_numbers<[1], [0], [0], [1], [0, 0, 1, 1], [], []>} : vector<64x256xbf16>, vector<256x128xbf16>, vector<64x128xf32> -> vector<64x128xf32>
    %c0_3 = arith.constant 0 : index
    %c0_4 = arith.constant 0 : index
    %3 = vector.load %arg3[%c0_3, %c0_4] : memref<1x128xf32, #tpu.memory_space<vmem>>, vector<1x128xf32>
    %4 = vector.broadcast %3 : vector<1x128xf32> to vector<64x128xf32>
    %5 = arith.addf %2, %4 : vector<64x128xf32>
    %cst_5 = arith.constant dense<0.000000e+00> : vector<64xf32>
    %6 = vector.multi_reduction <add>, %5, %cst_5 [1] : vector<64x128xf32> to vector<64xf32>
    %7 = vector.shape_cast %6 : vector<64xf32> to vector<64x1xf32>
    %cst_6 = arith.constant 7.812500e-03 : f32
    %8 = vector.broadcast %cst_6 : f32 to vector<64x1xf32>
    %9 = arith.mulf %7, %8 : vector<64x1xf32>
    %10 = vector.broadcast %9 : vector<64x1xf32> to vector<64x128xf32>
    %11 = arith.subf %5, %10 : vector<64x128xf32>
    %12 = arith.mulf %11, %11 : vector<64x128xf32>
    %cst_7 = arith.constant dense<0.000000e+00> : vector<64xf32>
    %13 = vector.multi_reduction <add>, %12, %cst_7 [1] : vector<64x128xf32> to vector<64xf32>
    %14 = vector.shape_cast %13 : vector<64xf32> to vector<64x1xf32>
    %cst_8 = arith.constant 7.812500e-03 : f32
    %15 = vector.broadcast %cst_8 : f32 to vector<64x1xf32>
    %16 = arith.mulf %14, %15 : vector<64x1xf32>
    %cst_9 = arith.constant 9.99999974E-6 : f32
    %17 = vector.broadcast %cst_9 : f32 to vector<64x1xf32>
    %18 = arith.addf %16, %17 : vector<64x1xf32>
    %19 = math.rsqrt %18 : vector<64x1xf32>
    %20 = vector.broadcast %19 : vector<64x1xf32> to vector<64x128xf32>
    %21 = arith.mulf %11, %20 : vector<64x128xf32>
    %c0_10 = arith.constant 0 : index
    %c0_11 = arith.constant 0 : index
    %22 = vector.load %arg4[%c0_10, %c0_11] : memref<1x128xf32, #tpu.memory_space<vmem>>, vector<1x128xf32>
    %23 = vector.broadcast %22 : vector<1x128xf32> to vector<64x128xf32>
    %24 = arith.mulf %21, %23 : vector<64x128xf32>
    %c0_12 = arith.constant 0 : index
    %c0_13 = arith.constant 0 : index
    %25 = vector.load %arg5[%c0_12, %c0_13] : memref<1x128xf32, #tpu.memory_space<vmem>>, vector<1x128xf32>
    %26 = vector.broadcast %25 : vector<1x128xf32> to vector<64x128xf32>
    %27 = arith.addf %24, %26 : vector<64x128xf32>
    %c0_14 = arith.constant 0 : index
    %c0_15 = arith.constant 0 : index
    %28 = vector.load %arg6[%c0_14, %c0_15] : memref<64x128xf32, #tpu.memory_space<vmem>>, vector<64x128xf32>
    tpu.vector_store %arg6[%c0_14, %c0_15], %27 {strides = array<i32>} : memref<64x128xf32, #tpu.memory_space<vmem>>, vector<64x128xf32>,
    return
  }
  func.func @transform_0(%arg0: i32) -> (i32, i32) {
    %c0_i32 = arith.constant 0 : i32
    %c0_i32_0 = arith.constant 0 : i32
    return %arg0, %c0_i32 : i32, i32
  }
  func.func @transform_1(%arg0: i32) -> (i32, i32) {
    %c0_i32 = arith.constant 0 : i32
    %c0_i32_0 = arith.constant 0 : i32
    %c0_i32_1 = arith.constant 0 : i32
    return %c0_i32, %c0_i32_0 : i32, i32
  }
  func.func @transform_2(%arg0: i32) -> (i32, i32) {
    %c0_i32 = arith.constant 0 : i32
    %c0_i32_0 = arith.constant 0 : i32
    %c0_i32_1 = arith.constant 0 : i32
    return %c0_i32, %c0_i32_0 : i32, i32
  }
  func.func @transform_3(%arg0: i32) -> (i32, i32) {
    %c0_i32 = arith.constant 0 : i32
    %c0_i32_0 = arith.constant 0 : i32
    %c0_i32_1 = arith.constant 0 : i32
    return %c0_i32, %c0_i32_0 : i32, i32
  }
  func.func @transform_4(%arg0: i32) -> (i32, i32) {
    %c0_i32 = arith.constant 0 : i32
    %c0_i32_0 = arith.constant 0 : i32
    %c0_i32_1 = arith.constant 0 : i32
    return %c0_i32, %c0_i32_0 : i32, i32
  }
  func.func @transform_5(%arg0: i32) -> (i32, i32) {
    %c0_i32 = arith.constant 0 : i32
    %c0_i32_0 = arith.constant 0 : i32
    return %arg0, %c0_i32 : i32, i32
  }
}

</mosaic_0001>

<llo_original>
// kernel: tpu_custom_call.1
$region0: #{tpu_custom_call.1}
  #allocation0 [shape = 'u32[]', space=smem, size = 0x4, offset = 0x4, fixed_abs, tag = 'smem constant byte address 0x4 - core index']
  #allocation1 [shape = 'u32[144,128]{1,0:T(1,128)}', space=vmem, size = 0x12000, scoped, tag = 'internal scratch']
  %s0 = inlined_call_operand.hbm [shape: bf16[96,256], index: 0, kind: input, shape index: {}]
  %s1 = inlined_call_operand.hbm [shape: bf16[256,128], index: 1, kind: input, shape index: {}]
  %s2 = inlined_call_operand.vmem [shape: f32[1,128], index: 2, kind: input, shape index: {}]
  %s3 = inlined_call_operand.vmem [shape: f32[1,128], index: 3, kind: input, shape index: {}]
  %s4 = inlined_call_operand.vmem [shape: f32[1,128], index: 4, kind: input, shape index: {}]
  %s5 = inlined_call_operand.hbm [shape: f32[96,128], index: 5, kind: output, shape index: {}]
  %s6 = sld [smem:[#allocation0]]
  $region61: #{tpu_custom_call.1} parent=0
    _
  %s8 = ssub.s32 1, %s6
  %s9 = scalar_select 0, %s8, %s6
  $region1: #{tpu_custom_call.1} parent=0
    #allocation2 [shape = 'u8[65536]{0}', space=vmem, size = 0x10000, scoped, tag = 'input window, operand 0']
    #allocation3 [shape = 's32[2]{0}', space=sflag, size = 0x8, scoped, tag = 'scoped memory for tpu_custom_call.1']
    #allocation4 [shape = 's32[2]{0}', space=sflag, size = 0x8, scoped, tag = 'scoped memory for tpu_custom_call.1']
    #allocation5 [shape = 'u8[65536]{0}', space=vmem, size = 0x10000, scoped, tag = 'input window, operand 1, single buffered']
    #allocation6 [shape = 's32[1]{0}', space=sflag, size = 0x4, scoped, tag = 'scoped memory for tpu_custom_call.1']
    #allocation7 [shape = 'u8[65536]{0}', space=vmem, size = 0x10000, scoped, tag = 'output window, operand 0']
    %10 = vsyncpa [#allocation3], 0
    %s11 = scalar_lea.sflag [#allocation3], 1
    %12 = vsyncpa %s11, 0
    %13 = vsyncpa [#allocation6], 0
    %14 = vsyncpa [#allocation4], 0
    %s15 = scalar_lea.sflag [#allocation4], 1
    %16 = vsyncpa %s15, 0
    loop: start=0, step=1, limit=4
    $region2: #{tpu_custom_call.1} parent=1 // loop_pre_header
      _
    $region3: #{tpu_custom_call.1} parent=1 // loop_header
      %s18 = sphi 0, %s22
      %p19 = scmp.ge.s32.totalorder %s18, 4
      %s28 = sphi 0, %s30
      %s31 = sphi 0, %s28
      %s32 = sphi 0, %s31
      %s48 = sphi 0, %s32
      %s52 = sphi 0, %s52
      %s54 = sphi 0, %s52
      %s55 = sphi 0, %s54
      %s69 = sphi 0, %s55
      %s73 = sphi 0, %s73
      %s75 = sphi 0, %s73
      %s76 = sphi 0, %s75
      %s90 = sphi 0, %s76
      %s94 = sphi 0, %s94
      %s96 = sphi 0, %s94
      %s97 = sphi 0, %s96
      %s111 = sphi 0, %s97
      %s115 = sphi 0, %s115
      %s117 = sphi 0, %s115
      %s118 = sphi 0, %s117
      %s132 = sphi 0, %s118
      %s138 = sphi 0, %s140
      %s141 = sphi 0, %s138
      %s142 = sphi 0, %s141
      %s158 = sphi 0, %s142
    $region4: #{tpu_custom_call.1} parent=1 // loop_header_branch
      %21 = sbr.rel (%p19) target = $region8
    $region5: #{tpu_custom_call.1} parent=1 // loop_body
      %s23 = ssub.s32 %s18, 1
      %s24 = ssub.s32 %s18, 2
      %s25 = sadd.s32 %s18, 1
      %s26 = ssub.s32 %s18, %s25
      %p27 = scmp.eq.s32.totalorder %s26, 0
      %s29 = sadd.s32 %s28, 1
      %s30 = scalar_select %p27, %s28, %s29
      %p33 = pneg %p27
      %p34 = scmp.eq.s32.totalorder %s18, 1
      %p35 = por %p33, %p34
      %p36 = scmp.ne.s32.totalorder %s28, %s31
      %p37 = scmp.eq.s32.totalorder %s18, 0
      %p38 = por %p36, %p37
      %p39 = scmp.ne.s32.totalorder %s28, %s31
      %p40 = scmp.eq.s32.totalorder %s23, 1
      %p41 = por %p39, %p40
      %p42 = scmp.ne.s32.totalorder %s31, %s32
      %p43 = scmp.eq.s32.totalorder %s23, 0
      %p44 = por %p42, %p43
      %p45 = scmp.ne.s32.totalorder %s31, %s32
      %p46 = scmp.eq.s32.totalorder %s24, 1
      %p47 = por %p45, %p46
      %p49 = scmp.ne.s32.totalorder %s32, %s48
      %p50 = scmp.eq.s32.totalorder %s24, 0
      %p51 = por %p49, %p50
      %s53 = sadd.s32 %s52, 1
      %p56 = scmp.eq.s32.totalorder %s18, 1
      %p57 = scmp.ne.s32.totalorder %s52, %s54
      %p58 = scmp.eq.s32.totalorder %s18, 0
      %p59 = por %p57, %p58
      %p60 = scmp.ne.s32.totalorder %s52, %s54
      %p61 = scmp.eq.s32.totalorder %s23, 1
      %p62 = por %p60, %p61
      %p63 = scmp.ne.s32.totalorder %s54, %s55
      %p64 = scmp.eq.s32.totalorder %s23, 0
      %p65 = por %p63, %p64
      %p66 = scmp.ne.s32.totalorder %s54, %s55
      %p67 = scmp.eq.s32.totalorder %s24, 1
      %p68 = por %p66, %p67
      %p70 = scmp.ne.s32.totalorder %s55, %s69
      %p71 = scmp.eq.s32.totalorder %s24, 0
      %p72 = por %p70, %p71
      %s74 = sadd.s32 %s73, 1
      %p77 = scmp.eq.s32.totalorder %s18, 1
      %p78 = scmp.ne.s32.totalorder %s73, %s75
      %p79 = scmp.eq.s32.totalorder %s18, 0
      %p80 = por %p78, %p79
      %p81 = scmp.ne.s32.totalorder %s73, %s75
      %p82 = scmp.eq.s32.totalorder %s23, 1
      %p83 = por %p81, %p82
      %p84 = scmp.ne.s32.totalorder %s75, %s76
      %p85 = scmp.eq.s32.totalorder %s23, 0
      %p86 = por %p84, %p85
      %p87 = scmp.ne.s32.totalorder %s75, %s76
      %p88 = scmp.eq.s32.totalorder %s24, 1
      %p89 = por %p87, %p88
      %p91 = scmp.ne.s32.totalorder %s76, %s90
      %p92 = scmp.eq.s32.totalorder %s24, 0
      %p93 = por %p91, %p92
      %s95 = sadd.s32 %s94, 1
      %p98 = scmp.eq.s32.totalorder %s18, 1
      %p99 = scmp.ne.s32.totalorder %s94, %s96
      %p100 = scmp.eq.s32.totalorder %s18, 0
      %p101 = por %p99, %p100
      %p102 = scmp.ne.s32.totalorder %s94, %s96
      %p103 = scmp.eq.s32.totalorder %s23, 1
      %p104 = por %p102, %p103
      %p105 = scmp.ne.s32.totalorder %s96, %s97
      %p106 = scmp.eq.s32.totalorder %s23, 0
      %p107 = por %p105, %p106
      %p108 = scmp.ne.s32.totalorder %s96, %s97
      %p109 = scmp.eq.s32.totalorder %s24, 1
      %p110 = por %p108, %p109
      %p112 = scmp.ne.s32.totalorder %s97, %s111
      %p113 = scmp.eq.s32.totalorder %s24, 0
      %p114 = por %p112, %p113
      %s116 = sadd.s32 %s115, 1
      %p119 = scmp.eq.s32.totalorder %s18, 1
      %p120 = scmp.ne.s32.totalorder %s115, %s117
      %p121 = scmp.eq.s32.totalorder %s18, 0
      %p122 = por %p120, %p121
      %p123 = scmp.ne.s32.totalorder %s115, %s117
      %p124 = scmp.eq.s32.totalorder %s23, 1
      %p125 = por %p123, %p124
      %p126 = scmp.ne.s32.totalorder %s117, %s118
      %p127 = scmp.eq.s32.totalorder %s23, 0
      %p128 = por %p126, %p127
      %p129 = scmp.ne.s32.totalorder %s117, %s118
      %p130 = scmp.eq.s32.totalorder %s24, 1
      %p131 = por %p129, %p130
      %p133 = scmp.ne.s32.totalorder %s118, %s132
      %p134 = scmp.eq.s32.totalorder %s24, 0
      %p135 = por %p133, %p134
      %s136 = ssub.s32 %s18, %s25
      %p137 = scmp.eq.s32.totalorder %s136, 0
      %s139 = sadd.s32 %s138, 1
      %s140 = scalar_select %p137, %s138, %s139
      %p143 = pneg %p137
      %p144 = scmp.eq.s32.totalorder %s18, 1
      %p145 = por %p143, %p144
      %p146 = scmp.ne.s32.totalorder %s138, %s141
      %p147 = scmp.eq.s32.totalorder %s18, 0
      %p148 = por %p146, %p147
      %p149 = scmp.ne.s32.totalorder %s138, %s141
      %p150 = scmp.eq.s32.totalorder %s23, 1
      %p151 = por %p149, %p150
      %p152 = scmp.ne.s32.totalorder %s141, %s142
      %p153 = scmp.eq.s32.totalorder %s23, 0
      %p154 = por %p152, %p153
      %p155 = scmp.ne.s32.totalorder %s141, %s142
      %p156 = scmp.eq.s32.totalorder %s24, 1
      %p157 = por %p155, %p156
      %p159 = scmp.ne.s32.totalorder %s142, %s158
      %p160 = scmp.eq.s32.totalorder %s24, 0
      %p161 = por %p159, %p160
      %p162 = scmp.le.s32.totalorder 1, %s18
      %p163 = scmp.lt.s32.totalorder %s18, 3
      %p164 = pnand %p162, %p163
      %p165 = pneg %p164
      // Predicated region
      $region9: #{tpu_custom_call.1} parent=5 // pred_check
        _
      $region10: #{tpu_custom_call.1} parent=5 // pred_check_branch
        %167 = sbr.rel (%p164) target = $region12
      $region11: #{tpu_custom_call.1} parent=5 // pred_region
        %s168 = ssub.s32 %s18, 1
        // Predicated region
        $region13: #{tpu_custom_call.1} parent=11 // pred_check
          %p169 = pneg %p65
        $region14: #{tpu_custom_call.1} parent=11 // pred_check_branch
          %171 = sbr.rel (%p169) target = $region16
        $region15: #{tpu_custom_call.1} parent=11 // pred_region
          %s173 = ssub.s32 2048, 2048
          %174 = vsyncadd [#allocation6], %s173
          %s175 = sshll.u32 [#allocation5], 4
          %s176 = int_to_ptr.vmem [resolvable:$true] %s175
          %181 = dma.hbm_to_vmem [thread:$0]  %s1, 2048, %s176, [#allocation6], 64, 64, 4
        $region16: #{tpu_custom_call.1} parent=11 // pred_fallthru
          _
        // Predicated region
        $region17: #{tpu_custom_call.1} parent=11 // pred_check
          %p182 = pneg %p86
        $region18: #{tpu_custom_call.1} parent=11 // pred_check_branch
          %184 = sbr.rel (%p182) target = $region20
        $region19: #{tpu_custom_call.1} parent=11 // pred_region
          _
        $region20: #{tpu_custom_call.1} parent=11 // pred_fallthru
          _
        // Predicated region
        $region21: #{tpu_custom_call.1} parent=11 // pred_check
          %p185 = pneg %p107
        $region22: #{tpu_custom_call.1} parent=11 // pred_check_branch
          %187 = sbr.rel (%p185) target = $region24
        $region23: #{tpu_custom_call.1} parent=11 // pred_region
          _
        $region24: #{tpu_custom_call.1} parent=11 // pred_fallthru
          _
        // Predicated region
        $region25: #{tpu_custom_call.1} parent=11 // pred_check
          %p188 = pneg %p128
        $region26: #{tpu_custom_call.1} parent=11 // pred_check_branch
          %190 = sbr.rel (%p188) target = $region28
        $region27: #{tpu_custom_call.1} parent=11 // pred_region
          _
        $region28: #{tpu_custom_call.1} parent=11 // pred_fallthru
          _
      $region12: #{tpu_custom_call.1} parent=5 // pred_fallthru
        _
      %p191 = scmp.lt.s32.totalorder %s18, 2
      // Predicated region
      $region29: #{tpu_custom_call.1} parent=5 // pred_check
        %p192 = pneg %p191
      $region30: #{tpu_custom_call.1} parent=5 // pred_check_branch
        %194 = sbr.rel (%p192) target = $region32
      $region31: #{tpu_custom_call.1} parent=5 // pred_region
        // Predicated region
        $region33: #{tpu_custom_call.1} parent=31 // pred_check
          %p195 = pneg %p38
        $region34: #{tpu_custom_call.1} parent=31 // pred_check_branch
          %197 = sbr.rel (%p195) target = $region36
        $region35: #{tpu_custom_call.1} parent=31 // pred_region
          %s198 = sand.u32 %s28, 1
          %s199 = scalar_lea.sflag [#allocation3], %s198
          %s200 = sand.u32 %s28, 1
          %s201 = smul.addr %s200, 64
          %s202 = scalar_lea.vmem [#allocation2], %s201
          %s203 = smul.u32 8, %s18
          %s204 = ssub.s32 12, %s203
          %p205 = scmp.lt.s32.totalorder %s204, 8
          %s206 = scalar_select %p205, %s204, 8
          %s207 = smul.u32 64, %s206
          %s208 = smul.u32 %s207, 2
          %s210 = ssub.s32 1024, %s208
          %211 = vsyncadd %s199, %s210
          %p212 = scmp.ne.s32.totalorder 0, %s208
          %s213 = smul.addr %s203, 2
          %s214 = smul.addr %s213, 64
          %s215 = scalar_lea.hbm %s0, %s214
          %s216 = smul.u32 8, %s206
          %s217 = sshll.u32 %s202, 4
          %s218 = int_to_ptr.vmem [resolvable:$true] %s217
          %s219 = sshll.u32 %s216, 4
          %223 = dma.hbm_to_vmem [thread:$0]  (%p212), %s215, %s219, %s218, %s199, 128, 128, 8
        $region36: #{tpu_custom_call.1} parent=31 // pred_fallthru
          _
      $region32: #{tpu_custom_call.1} parent=5 // pred_fallthru
        _
      %p224 = scmp.le.s32.totalorder 1, %s18
      %p225 = scmp.lt.s32.totalorder %s18, 3
      %p226 = pnand %p224, %p225
      %p227 = pneg %p226
      // Predicated region
      $region37: #{tpu_custom_call.1} parent=5 // pred_check
        _
      $region38: #{tpu_custom_call.1} parent=5 // pred_check_branch
        %229 = sbr.rel (%p226) target = $region40
      $region39: #{tpu_custom_call.1} parent=5 // pred_region
        %s230 = ssub.s32 %s18, 1
        %s231 = sand.u32 %s31, 1
        %s232 = scalar_lea.sflag [#allocation3], %s231
        %s233 = sand.u32 %s31, 1
        %s234 = smul.addr %s233, 64
        %s235 = scalar_lea.vmem [#allocation2], %s234
        // Predicated region
        $region41: #{tpu_custom_call.1} parent=39 // pred_check
          %p236 = pneg %p44
        $region42: #{tpu_custom_call.1} parent=39 // pred_check_branch
          %238 = sbr.rel (%p236) target = $region44
        $region43: #{tpu_custom_call.1} parent=39 // pred_region
          %239 = dma.done %s232, 1024
        $region44: #{tpu_custom_call.1} parent=39 // pred_fallthru
          _
        // Predicated region
        $region45: #{tpu_custom_call.1} parent=39 // pred_check
          %p240 = pneg %p65
        $region46: #{tpu_custom_call.1} parent=39 // pred_check_branch
          %242 = sbr.rel (%p240) target = $region48
        $region47: #{tpu_custom_call.1} parent=39 // pred_region
          %243 = dma.done [#allocation6], 2048
        $region48: #{tpu_custom_call.1} parent=39 // pred_fallthru
          _
        %s244 = sand.u32 %s31, 1
        %s245 = scalar_lea.sflag [#allocation3], %s244
        %s246 = sand.u32 %s31, 1
        %s247 = smul.addr %s246, 64
        %s248 = scalar_lea.vmem [#allocation2], %s247
        %p249 = pneg %p44
        %p250 = pneg %p41
        %p251 = pneg %p65
        %p252 = pneg %p62
        %p253 = pneg %p86
        %p254 = pneg %p83
        %p255 = pneg %p107
        %p256 = pneg %p104
        %p257 = pneg %p128
        %p258 = pneg %p125
        %p259 = pneg %p154
        %p260 = pneg %p151
        %s261 = sand.u32 %s141, 1
        %s262 = scalar_lea.sflag [#allocation4], %s261
        %s263 = sand.u32 %s141, 1
        %s264 = smul.addr %s263, 64
        %s265 = scalar_lea.vmem [#allocation7], %s264
        %s266 = smul.u32 8, %s23
        %s267 = ssub.s32 12, %s266
        %p268 = scmp.lt.s32.totalorder %s267, 8
        %s269 = scalar_select %p268, %s267, 8
        %s270 = smul.u32 64, %s269
        %s271 = smul.u32 %s270, 2
        %s272 = smul.u32 8, %s23
        %s273 = ssub.s32 12, %s272
        %p274 = scmp.lt.s32.totalorder %s273, 8
        %s275 = scalar_select %p274, %s273, 8
        %s276 = smul.u32 128, %s275
        %v278 = vld [vmem:[%s235] sm:$0xff]
        %v279 = vld [vmem:[%s235 + $0x8] sm:$0xff]
        %v280 = vld [vmem:[%s235 + $0x10] sm:$0xff]
        %v281 = vld [vmem:[%s235 + $0x18] sm:$0xff]
        %v282 = vld [vmem:[%s235 + $0x20] sm:$0xff]
        %v283 = vld [vmem:[%s235 + $0x28] sm:$0xff]
        %v284 = vld [vmem:[%s235 + $0x30] sm:$0xff]
        %v285 = vld [vmem:[%s235 + $0x38] sm:$0xff]
        %v286 = vld [vmem:[#allocation5] sm:$0xf]
        %v287 = vld [vmem:[#allocation5 + $0x4] sm:$0xf]
        %v288 = vld [vmem:[#allocation5 + $0x8] sm:$0xf]
        %v289 = vld [vmem:[#allocation5 + $0xc] sm:$0xf]
        %v290 = vld [vmem:[#allocation5 + $0x10] sm:$0xf]
        %v291 = vld [vmem:[#allocation5 + $0x14] sm:$0xf]
        %v292 = vld [vmem:[#allocation5 + $0x18] sm:$0xf]
        %v293 = vld [vmem:[#allocation5 + $0x1c] sm:$0xf]
        %v294 = vld [vmem:[#allocation5 + $0x20] sm:$0xf]
        %v295 = vld [vmem:[#allocation5 + $0x24] sm:$0xf]
        %v296 = vld [vmem:[#allocation5 + $0x28] sm:$0xf]
        %v297 = vld [vmem:[#allocation5 + $0x2c] sm:$0xf]
        %v298 = vld [vmem:[#allocation5 + $0x30] sm:$0xf]
        %v299 = vld [vmem:[#allocation5 + $0x34] sm:$0xf]
        %v300 = vld [vmem:[#allocation5 + $0x38] sm:$0xf]
        %v301 = vld [vmem:[#allocation5 + $0x3c] sm:$0xf]
        %v302 = vld [vmem:[#allocation5 + $0x40] sm:$0xf]
        %v303 = vld [vmem:[#allocation5 + $0x44] sm:$0xf]
        %v304 = vld [vmem:[#allocation5 + $0x48] sm:$0xf]
        %v305 = vld [vmem:[#allocation5 + $0x4c] sm:$0xf]
        %v306 = vld [vmem:[#allocation5 + $0x50] sm:$0xf]
        %v307 = vld [vmem:[#allocation5 + $0x54] sm:$0xf]
        %v308 = vld [vmem:[#allocation5 + $0x58] sm:$0xf]
        %v309 = vld [vmem:[#allocation5 + $0x5c] sm:$0xf]
        %v310 = vld [vmem:[#allocation5 + $0x60] sm:$0xf]
        %v311 = vld [vmem:[#allocation5 + $0x64] sm:$0xf]
        %v312 = vld [vmem:[#allocation5 + $0x68] sm:$0xf]
        %v313 = vld [vmem:[#allocation5 + $0x6c] sm:$0xf]
        %v314 = vld [vmem:[#allocation5 + $0x70] sm:$0xf]
        %v315 = vld [vmem:[#allocation5 + $0x74] sm:$0xf]
        %v316 = vld [vmem:[#allocation5 + $0x78] sm:$0xf]
        %v317 = vld [vmem:[#allocation5 + $0x7c] sm:$0xf]
        %v318 = vld [vmem:[%s2] sm:$0x1]
        %v320 = vlaneseq
        %v321 = vshrl.u32 %v320, 7
        %v322 = vsub.s32 0, %v321
        %v323 = vrot.slane %v318, %v322
        %v333 = vunpack.c.l.b16 %v278
        %v334 = vunpack.c.h.b16 %v278
        %v335 = vunpack.c.l.b16 %v279
        %v336 = vunpack.c.h.b16 %v279
        %v337 = vunpack.c.l.b16 %v280
        %v338 = vunpack.c.h.b16 %v280
        %v339 = vunpack.c.l.b16 %v281
        %v340 = vunpack.c.h.b16 %v281
        %v341 = vunpack.c.l.b16 %v282
        %v342 = vunpack.c.h.b16 %v282
        %v343 = vunpack.c.l.b16 %v283
        %v344 = vunpack.c.h.b16 %v283
        %v345 = vunpack.c.l.b16 %v284
        %v346 = vunpack.c.h.b16 %v284
        %v347 = vunpack.c.l.b16 %v285
        %v348 = vunpack.c.h.b16 %v285
        %v349 = vpack.c.b16 %v335, %v333
        %v350 = vpack.c.b16 %v336, %v334
        %v351 = vpack.c.b16 %v339, %v337
        %v352 = vpack.c.b16 %v340, %v338
        %v353 = vpack.c.b16 %v343, %v341
        %v354 = vpack.c.b16 %v344, %v342
        %v355 = vpack.c.b16 %v347, %v345
        %v356 = vpack.c.b16 %v348, %v346
        %v397 = vunpack.c.l.b16 %v286
        %v398 = vunpack.c.l.b16 %v287
        %v399 = vunpack.c.l.b16 %v288
        %v400 = vunpack.c.l.b16 %v289
        %v401 = vunpack.c.l.b16 %v290
        %v402 = vunpack.c.l.b16 %v291
        %v403 = vunpack.c.l.b16 %v292
        %v404 = vunpack.c.l.b16 %v293
        %v405 = vunpack.c.l.b16 %v294
        %v406 = vunpack.c.l.b16 %v295
        %v407 = vunpack.c.l.b16 %v296
        %v408 = vunpack.c.l.b16 %v297
        %v409 = vunpack.c.l.b16 %v298
        %v410 = vunpack.c.l.b16 %v299
        %v411 = vunpack.c.l.b16 %v300
        %v412 = vunpack.c.l.b16 %v301
        %v413 = vunpack.c.l.b16 %v302
        %v414 = vunpack.c.l.b16 %v303
        %v415 = vunpack.c.l.b16 %v304
        %v416 = vunpack.c.l.b16 %v305
        %v417 = vunpack.c.l.b16 %v306
        %v418 = vunpack.c.l.b16 %v307
        %v419 = vunpack.c.l.b16 %v308
        %v420 = vunpack.c.l.b16 %v309
        %v421 = vunpack.c.l.b16 %v310
        %v422 = vunpack.c.l.b16 %v311
        %v423 = vunpack.c.l.b16 %v312
        %v424 = vunpack.c.l.b16 %v313
        %v425 = vunpack.c.l.b16 %v314
        %v426 = vunpack.c.l.b16 %v315
        %v427 = vunpack.c.l.b16 %v316
        %v428 = vunpack.c.l.b16 %v317
        %v429 = vpack.c.b16 %v398, %v397
        %v430 = vpack.c.b16 %v400, %v399
        %v431 = vpack.c.b16 %v402, %v401
        %v432 = vpack.c.b16 %v404, %v403
        %v433 = vpack.c.b16 %v406, %v405
        %v434 = vpack.c.b16 %v408, %v407
        %v435 = vpack.c.b16 %v410, %v409
        %v436 = vpack.c.b16 %v412, %v411
        %v437 = vpack.c.b16 %v414, %v413
        %v438 = vpack.c.b16 %v416, %v415
        %v439 = vpack.c.b16 %v418, %v417
        %v440 = vpack.c.b16 %v420, %v419
        %v441 = vpack.c.b16 %v422, %v421
        %v442 = vpack.c.b16 %v424, %v423
        %v443 = vpack.c.b16 %v426, %v425
        %v444 = vpack.c.b16 %v428, %v427
        %461 = vmatprep.subr.bf16.mxu0 0
        %462 = vmatpush1.bf16.msra.mxu0 %v429
        %463 = vmatprep.subr.bf16.mxu0 0
        %464 = vmatpush1.bf16.msra.mxu0 %v430
        %465 = vmatprep.subr.bf16.mxu0 0
        %466 = vmatpush1.bf16.msra.mxu0 %v431
        %467 = vmatprep.subr.bf16.mxu0 0
        %468 = vmatpush1.bf16.msra.mxu0 %v432
        %469 = vmatprep.subr.bf16.mxu0 0
        %470 = vmatpush1.bf16.msra.mxu0 %v433
        %471 = vmatprep.subr.bf16.mxu0 0
        %472 = vmatpush1.bf16.msra.mxu0 %v434
        %473 = vmatprep.subr.bf16.mxu0 0
        %474 = vmatpush1.bf16.msra.mxu0 %v435
        %475 = vmatprep.subr.bf16.mxu0 0
        %476 = vmatpush1.bf16.msra.mxu0 %v436
        %477 = vmatprep.subr.bf16.mxu0 0
        %478 = vmatpush1.bf16.msra.mxu0 %v437
        %479 = vmatprep.subr.bf16.mxu0 0
        %480 = vmatpush1.bf16.msra.mxu0 %v438
        %481 = vmatprep.subr.bf16.mxu0 0
        %482 = vmatpush1.bf16.msra.mxu0 %v439
        %483 = vmatprep.subr.bf16.mxu0 0
        %484 = vmatpush1.bf16.msra.mxu0 %v440
        %485 = vmatprep.subr.bf16.mxu0 0
        %486 = vmatpush1.bf16.msra.mxu0 %v441
        %487 = vmatprep.subr.bf16.mxu0 0
        %488 = vmatpush1.bf16.msra.mxu0 %v442
        %489 = vmatprep.subr.bf16.mxu0 0
        %490 = vmatpush1.bf16.msra.mxu0 %v443
        %491 = vmatprep.subr.bf16.mxu0 0
        %492 = vmatpush1.bf16.msra.mxu0 %v444
        %493 = vmatprep.mubr.bf16.mxu0 %v350
        %494 = vmatmul.mubr.bf16.gmra.mrb[0].mxu0 %v349
        %v495 = vpop.f32.mrb[0].mxu0
        %v496 = vadd.f32 %v323, %v495
        %v497 = vpop.f32.mrb[0].mxu0
        %v498 = vpop.f32.mrb[0].mxu0
        %v499 = vadd.f32 %v323, %v498
        %v500 = vpop.f32.mrb[0].mxu0
        %501 = vmatprep.mubr.bf16.mxu0 %v352
        %502 = vmatmul.mubr.bf16.gmra.mrb[0].mxu0 %v351
        %v503 = vpop.f32.mrb[0].mxu0
        %v504 = vadd.f32 %v323, %v503
        %v505 = vpop.f32.mrb[0].mxu0
        %v506 = vpop.f32.mrb[0].mxu0
        %v507 = vadd.f32 %v323, %v506
        %v508 = vpop.f32.mrb[0].mxu0
        %509 = vmatprep.mubr.bf16.mxu0 %v354
        %510 = vmatmul.mubr.bf16.gmra.mrb[0].mxu0 %v353
        %v511 = vpop.f32.mrb[0].mxu0
        %v512 = vadd.f32 %v323, %v511
        %v513 = vpop.f32.mrb[0].mxu0
        %v514 = vpop.f32.mrb[0].mxu0
        %v515 = vadd.f32 %v323, %v514
        %v516 = vpop.f32.mrb[0].mxu0
        %517 = vmatprep.mubr.bf16.mxu0 %v356
        %518 = vmatmul.mubr.bf16.gmra.mrb[0].mxu0 %v355
        %v519 = vpop.f32.mrb[0].mxu0
        %v520 = vadd.f32 %v323, %v519
        %v521 = vpop.f32.mrb[0].mxu0
        %v522 = vpop.f32.mrb[0].mxu0
        %v523 = vadd.f32 %v323, %v522
        %v524 = vpop.f32.mrb[0].mxu0
        %525 = vdwg.mxu0
        %526 = vadd.xlane.f32.xlu0 %v496
        %v527 = vpop.xlane.xlu0 %526
        %528 = vadd.xlane.f32.xlu0 %v499
        %v529 = vpop.xlane.xlu0 %528
        %530 = vadd.xlane.f32.xlu0 %v504
        %v531 = vpop.xlane.xlu0 %530
        %532 = vadd.xlane.f32.xlu0 %v507
        %v533 = vpop.xlane.xlu0 %532
        %534 = vadd.xlane.f32.xlu0 %v512
        %v535 = vpop.xlane.xlu0 %534
        %536 = vadd.xlane.f32.xlu0 %v515
        %v537 = vpop.xlane.xlu0 %536
        %538 = vadd.xlane.f32.xlu0 %v520
        %v539 = vpop.xlane.xlu0 %538
        %540 = vadd.xlane.f32.xlu0 %v523
        %v541 = vpop.xlane.xlu0 %540
        %v542 = vmul.f32 %v527, 0.0078125
        %v543 = vmul.f32 %v529, 0.0078125
        %v544 = vmul.f32 %v531, 0.0078125
        %v545 = vmul.f32 %v533, 0.0078125
        %v546 = vmul.f32 %v535, 0.0078125
        %v547 = vmul.f32 %v537, 0.0078125
        %v548 = vmul.f32 %v539, 0.0078125
        %v549 = vmul.f32 %v541, 0.0078125
        %v550 = vsub.f32 %v496, %v542
        %v551 = vsub.f32 %v499, %v543
        %v552 = vsub.f32 %v504, %v544
        %v553 = vsub.f32 %v507, %v545
        %v554 = vsub.f32 %v512, %v546
        %v555 = vsub.f32 %v515, %v547
        %v556 = vsub.f32 %v520, %v548
        %v557 = vsub.f32 %v523, %v549
        %v558 = vmul.f32 %v550, %v550
        %v559 = vmul.f32 %v551, %v551
        %v560 = vmul.f32 %v552, %v552
        %v561 = vmul.f32 %v553, %v553
        %v562 = vmul.f32 %v554, %v554
        %v563 = vmul.f32 %v555, %v555
        %v564 = vmul.f32 %v556, %v556
        %v565 = vmul.f32 %v557, %v557
        %566 = vadd.xlane.f32.xlu0 %v558
        %v567 = vpop.xlane.xlu0 %566
        %568 = vadd.xlane.f32.xlu0 %v559
        %v569 = vpop.xlane.xlu0 %568
        %570 = vadd.xlane.f32.xlu0 %v560
        %v571 = vpop.xlane.xlu0 %570
        %572 = vadd.xlane.f32.xlu0 %v561
        %v573 = vpop.xlane.xlu0 %572
        %574 = vadd.xlane.f32.xlu0 %v562
        %v575 = vpop.xlane.xlu0 %574
        %576 = vadd.xlane.f32.xlu0 %v563
        %v577 = vpop.xlane.xlu0 %576
        %578 = vadd.xlane.f32.xlu0 %v564
        %v579 = vpop.xlane.xlu0 %578
        %580 = vadd.xlane.f32.xlu0 %v565
        %v581 = vpop.xlane.xlu0 %580
        %v582 = vmul.f32 %v567, 0.0078125
        %v583 = vmul.f32 %v569, 0.0078125
        %v584 = vmul.f32 %v571, 0.0078125
        %v585 = vmul.f32 %v573, 0.0078125
        %v586 = vmul.f32 %v575, 0.0078125
        %v587 = vmul.f32 %v577, 0.0078125
        %v588 = vmul.f32 %v579, 0.0078125
        %v589 = vmul.f32 %v581, 0.0078125
        %v590 = vadd.f32 %v582, 1e-05
        %v591 = vadd.f32 %v583, 1e-05
        %v592 = vadd.f32 %v584, 1e-05
        %v593 = vadd.f32 %v585, 1e-05
        %v594 = vadd.f32 %v586, 1e-05
        %v595 = vadd.f32 %v587, 1e-05
        %v596 = vadd.f32 %v588, 1e-05
        %v597 = vadd.f32 %v589, 1e-05
        %v598 = vrsqrt.pop %v590
        %v599 = vrsqrt.pop %v591
        %v600 = vrsqrt.pop %v592
        %v601 = vrsqrt.pop %v593
        %v602 = vrsqrt.pop %v594
        %v603 = vrsqrt.pop %v595
        %v604 = vrsqrt.pop %v596
        %v605 = vrsqrt.pop %v597
        %v606 = vmul.f32 %v550, %v598
        %v607 = vmul.f32 %v551, %v599
        %v608 = vmul.f32 %v552, %v600
        %v609 = vmul.f32 %v553, %v601
        %v610 = vmul.f32 %v554, %v602
        %v611 = vmul.f32 %v555, %v603
        %v612 = vmul.f32 %v556, %v604
        %v613 = vmul.f32 %v557, %v605
        %v614 = vld [vmem:[%s3] sm:$0x1]
        %v616 = vlaneseq
        %v617 = vshrl.u32 %v616, 7
        %v618 = vsub.s32 0, %v617
        %v619 = vrot.slane %v614, %v618
        %v621 = vmul.f32 %v606, %v619
        %v622 = vmul.f32 %v607, %v619
        %v623 = vmul.f32 %v608, %v619
        %v624 = vmul.f32 %v609, %v619
        %v625 = vmul.f32 %v610, %v619
        %v626 = vmul.f32 %v611, %v619
        %v627 = vmul.f32 %v612, %v619
        %v628 = vmul.f32 %v613, %v619
        %v629 = vld [vmem:[%s4] sm:$0x1]
        %v631 = vlaneseq
        %v632 = vshrl.u32 %v631, 7
        %v633 = vsub.s32 0, %v632
        %v634 = vrot.slane %v629, %v633
        %v636 = vadd.f32 %v621, %v634
        %v637 = vadd.f32 %v622, %v634
        %v638 = vadd.f32 %v623, %v634
        %v639 = vadd.f32 %v624, %v634
        %v640 = vadd.f32 %v625, %v634
        %v641 = vadd.f32 %v626, %v634
        %v642 = vadd.f32 %v627, %v634
        %v643 = vadd.f32 %v628, %v634
        %644 = vst [vmem:[%s265] sm:$0xff] %v636
        %645 = vst [vmem:[%s265 + $0x8] sm:$0xff] %v637
        %646 = vst [vmem:[%s265 + $0x10] sm:$0xff] %v638
        %647 = vst [vmem:[%s265 + $0x18] sm:$0xff] %v639
        %648 = vst [vmem:[%s265 + $0x20] sm:$0xff] %v640
        %649 = vst [vmem:[%s265 + $0x28] sm:$0xff] %v641
        %650 = vst [vmem:[%s265 + $0x30] sm:$0xff] %v642
        %651 = vst [vmem:[%s265 + $0x38] sm:$0xff] %v643
        %s652 = sand.u32 %s141, 1
        %s653 = scalar_lea.sflag [#allocation4], %s652
        %s654 = sand.u32 %s141, 1
        %s655 = smul.addr %s654, 64
        %s656 = scalar_lea.vmem [#allocation7], %s655
        // Predicated region
        $region49: #{tpu_custom_call.1} parent=39 // pred_check
          %p657 = pneg %p151
        $region50: #{tpu_custom_call.1} parent=39 // pred_check_branch
          %659 = sbr.rel (%p657) target = $region52
        $region51: #{tpu_custom_call.1} parent=39 // pred_region
          %s660 = smul.u32 8, %s23
          %s661 = ssub.s32 12, %s660
          %p662 = scmp.lt.s32.totalorder %s661, 8
          %s663 = scalar_select %p662, %s661, 8
          %s664 = smul.u32 128, %s663
          %s666 = ssub.s32 1024, %s664
          %667 = vsyncadd %s653, %s666
          %p668 = scmp.ne.s32.totalorder 0, %s664
          %s669 = smul.addr %s660, 128
          %s670 = scalar_lea.hbm %s5, %s669
          %s671 = smul.u32 8, %s663
          %s672 = sshll.u32 %s656, 4
          %s673 = int_to_ptr.vmem [resolvable:$true] %s672
          %s674 = sshll.u32 %s671, 4
          %678 = dma.vmem_to_hbm [thread:$0]  (%p668), %s673, %s674, %s670, %s653, 128, 128, 8
        $region52: #{tpu_custom_call.1} parent=39 // pred_fallthru
          _
      $region40: #{tpu_custom_call.1} parent=5 // pred_fallthru
        _
      %p679 = scmp.le.s32.totalorder 2, %s18
      // Predicated region
      $region53: #{tpu_custom_call.1} parent=5 // pred_check
        %p680 = pneg %p679
      $region54: #{tpu_custom_call.1} parent=5 // pred_check_branch
        %682 = sbr.rel (%p680) target = $region56
      $region55: #{tpu_custom_call.1} parent=5 // pred_region
        %s683 = ssub.s32 %s18, 2
        // Predicated region
        $region57: #{tpu_custom_call.1} parent=55 // pred_check
          %p684 = pneg %p157
        $region58: #{tpu_custom_call.1} parent=55 // pred_check_branch
          %686 = sbr.rel (%p684) target = $region60
        $region59: #{tpu_custom_call.1} parent=55 // pred_region
          %s687 = sand.u32 %s142, 1
          %s688 = scalar_lea.sflag [#allocation4], %s687
          %s689 = sand.u32 %s142, 1
          %s690 = smul.addr %s689, 64
          %s691 = scalar_lea.vmem [#allocation7], %s690
          %692 = dma.done %s688, 1024
        $region60: #{tpu_custom_call.1} parent=55 // pred_fallthru
          _
      $region56: #{tpu_custom_call.1} parent=5 // pred_fallthru
        _
    $region6: #{tpu_custom_call.1} parent=1 // loop_footer
      %s22 = sadd.s32 1, %s18
    $region7: #{tpu_custom_call.1} parent=1 // loop_footer_branch
      %17 = sbr.rel target = $region3
    $region8: #{tpu_custom_call.1} parent=1 // loop_exit
      _
    %693 = vsyncpa [#allocation3], 1
    %s694 = scalar_lea.sflag [#allocation3], 1
    %695 = vsyncpa %s694, 1
    %696 = vsyncpa [#allocation6], 1
    %697 = vsyncpa [#allocation4], 1
    %s698 = scalar_lea.sflag [#allocation4], 1
    %699 = vsyncpa %s698, 1

</llo_original>
